<compile_context>
chip_gen: v6e
topology: v6e:2x2x1
jax: 0.10.0
libtpu: 0.0.40
codegen_flags: <defaults>
</compile_context>

<pallas_src>
import math

import jax
import jax.numpy as jnp
from jax import lax
from jax.experimental import pallas as pl
from jax.experimental.pallas import tpu as pltpu

D_K = 64                      # module hardcodes d_k = d_v = 64
_SCALE = 1.0 / math.sqrt(D_K)  # = 0.125, exactly representable in bf16
_MASK_FILL = -1000000000.0    # torch masked_fill_(attn_mask, -1e9)


def _sdpa_kernel(q_ref, k_ref, v_ref, mask_ref, ctx_ref, attn_ref):
    # Blocks: q (1, TQ, dk) bf16, k/v (1, Lk, d) bf16, mask (1, TQ, Lk) int8,
    #         ctx (1, TQ, dv) f32, attn (1, TQ, Lk) attn_dtype.
    q = q_ref[0]                                # [TQ, dk] bf16
    k = k_ref[0]                                # [Lk, dk] bf16
    v = v_ref[0]                                # [Lk, dv] bf16
    mask = mask_ref[0]                          # [TQ, Lk] int8, nonzero == masked

    # Fold 1/sqrt(d_k) into Q (O(TQ*dk) multiplies; 0.125 is exact in bf16).
    q16 = q * _SCALE

    # scores = (Q/sqrt(d_k)) @ K^T — NT dot_general, bf16 MXU, f32 accumulate.
    scores = lax.dot_general(
        q16, k,
        dimension_numbers=(((1,), (1,)), ((), ())),
        preferred_element_type=jnp.float32)     # [TQ, Lk] f32

    # masked_fill_(attn_mask, -1e9)
    scores = jnp.where(mask != 0, _MASK_FILL, scores)

    # Numerically stable softmax over the key axis.
    row_max = jnp.max(scores, axis=-1, keepdims=True)
    exps = jnp.exp(scores - row_max)
    denom = jnp.sum(exps, axis=-1, keepdims=True)
    attn_f32 = exps * pl.reciprocal(denom, approx=True)   # [TQ, Lk] f32

    attn16 = attn_f32.astype(jnp.bfloat16)
    # context = attn @ V  (bf16 MXU inputs, f32 accumulation).
    ctx = jnp.dot(attn16, v, preferred_element_type=jnp.float32)   # [TQ, dv]

    attn_ref[0] = attn16.astype(attn_ref.dtype)
    ctx_ref[0] = ctx.astype(ctx_ref.dtype)


def _vmem_config():
    """(vmem_budget_bytes, vmem_limit_bytes) per TPU generation."""
    vmem_cap = None
    try:
        info = pltpu.get_tpu_info()
        vmem_cap = getattr(info, "vmem_capacity_bytes", None)
    except Exception:
        vmem_cap = None
    if not vmem_cap or vmem_cap <= 0:
        vmem_cap = 64 * 1024 * 1024            # conservative: assume v7x
    if vmem_cap >= 100 * 1024 * 1024:          # v5e / v6e (128 MiB VMEM)
        return 64 * 1024 * 1024, 100 * 1024 * 1024
    return 20 * 1024 * 1024, 48 * 1024 * 1024  # v7x (64 MiB VMEM)


def _choose_block_q(Lq, Lk, dk, dv, attn_itemsize, max_block_q, vmem_budget_bytes):
    """Largest q-tile (multiple of 128 when possible, else 8) dividing Lq that
    keeps the full working set — resident double-buffered bf16 K/V, int8 mask
    tile, attn output tile, Q/ctx tiles and f32 temporaries — under budget."""
    # tq-independent: K and V, 2 pipeline buffers each, bf16.
    fixed = 2 * 2 * Lk * (dk + dv) // 2 * 2    # == 2*2*Lk*dk*2 when dk == dv
    fixed = 2 * 2 * Lk * dk * 2 + 2 * 2 * Lk * dv * 2
    per_row = Lk * (2 * 1                      # int8 mask tile, double buffered
                    + 2 * attn_itemsize        # attn output tile, double buffered
                    + 4 * 4)                   # f32 scores/exps/attn temporaries
    per_row += dk * 2 * 2 + dv * 4 * 2         # Q (bf16) + ctx (f32) tiles, x2 buffers
    avail = vmem_budget_bytes - fixed
    cap = max(8, avail // max(per_row, 1)) if avail > 0 else 8
    tq = int(min(max_block_q, Lq, cap))
    if tq >= 128 and Lq % 128 == 0:
        tq = (tq // 128) * 128                 # keep the 256-wide MXU M dim full
        while tq > 128 and Lq % tq != 0:
            tq -= 128
    else:
        tq = max(8, (tq // 8) * 8)
        while tq > 8 and Lq % tq != 0:
            tq -= 8
        if Lq % tq != 0:
            tq = Lq                            # fall back: one q-tile for all of Lq
    return tq


def scaled_dot_product_attention(Q, K, V, attn_mask, *, block_q=512,
                                 attn_dtype=jnp.bfloat16):
    """Q: [B,H,Lq,d_k], K: [B,H,Lk,d_k], V: [B,H,Lk,d_v],
    attn_mask: [B,H,Lq,Lk] or head-broadcast [B,1,Lq,Lk] (truthy == masked).

    Returns (context [B,H,Lq,d_v] f32, attn [B,H,Lq,Lk] attn_dtype), matching
    the PyTorch ScaledDotProductAttention.forward.

    Precision notes (vs torch f32): QK^T and attn@V use bf16 MXU operands with
    f32 accumulation; softmax uses an approximate (EUP) reciprocal; `attn` is
    returned in bf16 by default (pass attn_dtype=jnp.float32 to match torch's
    output dtype exactly, at ~2x the O(L^2) HBM write cost).
    """
    B, H, Lq, dk = Q.shape
    _, _, Lk, dv = V.shape
    assert K.shape == (B, H, Lk, dk)
    assert attn_mask.shape in ((B, H, Lq, Lk), (B, 1, Lq, Lk)), attn_mask.shape

    BH = B * H
    q3 = Q.reshape(BH, Lq, dk).astype(jnp.bfloat16)
    k3 = K.reshape(BH, Lk, dk).astype(jnp.bfloat16)
    v3 = V.reshape(BH, Lk, dv).astype(jnp.bfloat16)

    # Head-broadcast masks are streamed once per batch, not once per head.
    Hm = attn_mask.shape[1]
    mask3 = attn_mask.reshape(B * Hm, Lq, Lk).astype(jnp.int8)
    if Hm == 1:
        m_index = lambda bh, qi: (bh // H, qi, 0)
    else:
        m_index = lambda bh, qi: (bh, qi, 0)

    vmem_budget, vmem_limit = _vmem_config()
    tq = _choose_block_q(Lq, Lk, dk, dv, jnp.dtype(attn_dtype).itemsize,
                         block_q, vmem_budget)
    grid = (BH, Lq // tq)

    q_spec = pl.BlockSpec((1, tq, dk), lambda bh, qi: (bh, qi, 0))
    k_spec = pl.BlockSpec((1, Lk, dk), lambda bh, qi: (bh, 0, 0))   # resident over qi
    v_spec = pl.BlockSpec((1, Lk, dv), lambda bh, qi: (bh, 0, 0))   # resident over qi
    m_spec = pl.BlockSpec((1, tq, Lk), m_index)
    ctx_spec = pl.BlockSpec((1, tq, dv), lambda bh, qi: (bh, qi, 0))
    attn_spec = pl.BlockSpec((1, tq, Lk), lambda bh, qi: (bh, qi, 0))

    ctx, attn = pl.pallas_call(
        _sdpa_kernel,
        out_shape=(
            jax.ShapeDtypeStruct((BH, Lq, dv), jnp.float32),
            jax.ShapeDtypeStruct((BH, Lq, Lk), attn_dtype),
        ),
        grid=grid,
        in_specs=[q_spec, k_spec, v_spec, m_spec],
        out_specs=(ctx_spec, attn_spec),
        compiler_params=pltpu.CompilerParams(
            # bh parallel (megacore splits on heads, preserving K/V residency),
            # qi arbitrary (keeps per-core K/V reuse across q-tiles).
            dimension_semantics=("parallel", "arbitrary"),
            vmem_limit_bytes=vmem_limit,
        ),
    )(q3, k3, v3, mask3)

    return ctx.reshape(B, H, Lq, dv), attn.reshape(B, H, Lq, Lk)


def _reference(Q, K, V, attn_mask):
    scores = jnp.einsum("bhqd,bhkd->bhqk", Q, K).astype(jnp.float32) * _SCALE
    scores = jnp.where(attn_mask, _MASK_FILL, scores)
    attn = jax.nn.softmax(scores, axis=-1)
    ctx = jnp.einsum("bhqk,bhkd->bhqd", attn, V.astype(jnp.float32))
    return ctx, attn


def _check(B, H, Lq, Lk, key, block_q=512, broadcast_mask=False):
    kq, kk, kv, km = jax.random.split(key, 4)
    Q = jax.random.normal(kq, (B, H, Lq, D_K), dtype=jnp.float32)
    K = jax.random.normal(kk, (B, H, Lk, D_K), dtype=jnp.float32)
    V = jax.random.normal(kv, (B, H, Lk, D_K), dtype=jnp.float32)
    mask_shape = (B, 1, Lq, Lk) if broadcast_mask else (B, H, Lq, Lk)
    attn_mask = jax.random.bernoulli(km, p=0.3, shape=mask_shape)  # True == masked

    ctx, attn = scaled_dot_product_attention(Q, K, V, attn_mask, block_q=block_q)
    jax.block_until_ready((ctx, attn))

    ctx_ref, attn_ref = _reference(Q, K, V, attn_mask)
    # bf16 MXU inputs, bf16 attn output, approx reciprocal -> compare against
    # the f32 reference with a modest tolerance.
    assert jnp.allclose(ctx.astype(jnp.float32), ctx_ref,
                        atol=2e-2, rtol=2e-2), "context mismatch"
    assert jnp.allclose(attn.astype(jnp.float32), attn_ref,
                        atol=2e-2, rtol=2e-2), "attn mismatch"


if __name__ == "__main__":
    root = jax.random.PRNGKey(0)
    k1, k2 = jax.random.split(root)
    # Small shape consistent with the module (d_k = d_v = 64), per-head mask.
    _check(B=2, H=2, Lq=8, Lk=8, key=k1)
    # Larger shape exercising the q-tiling path (2 q-tiles / head, K/V resident
    # across q-tiles) and the head-broadcast mask path.
    _check(B=1, H=2, Lq=256, Lk=256, key=k2, block_q=128, broadcast_mask=True)
    print("KERNEL_OK")
</pallas_src>

<mosaic_0001>
module attributes {stable_mosaic.version = 11 : i64} {
  func.func @_sdpa_kernel(%arg0: i32, %arg1: i32, %arg2: memref<1x8x64xbf16, #tpu.memory_space<vmem>>, %arg3: memref<1x8x64xbf16, #tpu.memory_space<vmem>>, %arg4: memref<1x8x64xbf16, #tpu.memory_space<vmem>>, %arg5: memref<1x8x8xi8, #tpu.memory_space<vmem>>, %arg6: memref<1x8x64xf32, #tpu.memory_space<vmem>>, %arg7: memref<1x8x8xbf16, #tpu.memory_space<vmem>>) attributes {dimension_semantics = [#tpu.dimension_semantics<parallel>, #tpu.dimension_semantics<arbitrary>], iteration_bounds = array<i64: 4, 1>, scalar_prefetch = 0 : i64, scratch_operands = 0 : i64, tpu.core_type = #tpu.core_type<tc>, window_params = [{transform_indices = @transform_0, window_bounds = array<i64: 1, 8, 64>}, {transform_indices = @transform_1, window_bounds = array<i64: 1, 8, 64>}, {transform_indices = @transform_2, window_bounds = array<i64: 1, 8, 64>}, {transform_indices = @transform_3, window_bounds = array<i64: 1, 8, 8>}, {transform_indices = @transform_4, window_bounds = array<i64: 1, 8, 64>}, {transform_indices = @transform_5, window_bounds = array<i64: 1, 8, 8>}]} {
    %c0 = arith.constant 0 : index
    %c0_0 = arith.constant 0 : index
    %c0_1 = arith.constant 0 : index
    %0 = vector.load %arg2[%c0, %c0_0, %c0_1] : memref<1x8x64xbf16, #tpu.memory_space<vmem>>, vector<1x8x64xbf16>
    %1 = vector.shape_cast %0 : vector<1x8x64xbf16> to vector<8x64xbf16>
    %c0_2 = arith.constant 0 : index
    %c0_3 = arith.constant 0 : index
    %c0_4 = arith.constant 0 : index
    %2 = vector.load %arg3[%c0_2, %c0_3, %c0_4] : memref<1x8x64xbf16, #tpu.memory_space<vmem>>, vector<1x8x64xbf16>
    %3 = vector.shape_cast %2 : vector<1x8x64xbf16> to vector<8x64xbf16>
    %c0_5 = arith.constant 0 : index
    %c0_6 = arith.constant 0 : index
    %c0_7 = arith.constant 0 : index
    %4 = vector.load %arg4[%c0_5, %c0_6, %c0_7] : memref<1x8x64xbf16, #tpu.memory_space<vmem>>, vector<1x8x64xbf16>
    %5 = vector.shape_cast %4 : vector<1x8x64xbf16> to vector<8x64xbf16>
    %c0_8 = arith.constant 0 : index
    %c0_9 = arith.constant 0 : index
    %c0_10 = arith.constant 0 : index
    %6 = vector.load %arg5[%c0_8, %c0_9, %c0_10] : memref<1x8x8xi8, #tpu.memory_space<vmem>>, vector<1x8x8xi8>
    %7 = vector.shape_cast %6 : vector<1x8x8xi8> to vector<8x8xi8>
    %cst = arith.constant 1.250000e-01 : bf16
    %8 = vector.broadcast %cst : bf16 to vector<8x64xbf16>
    %9 = arith.mulf %1, %8 : vector<8x64xbf16>
    %cst_11 = arith.constant dense<0.000000e+00> : vector<8x8xf32>
    %10 = tpu.matmul %9, %3, %cst_11 {dimension_numbers = #tpu.dot_dimension_numbers<[1], [1], [0], [0], [0, 0, 1, 0], [], []>} : vector<8x64xbf16>, vector<8x64xbf16>, vector<8x8xf32> -> vector<8x8xf32>
    %c0_i8 = arith.constant 0 : i8
    %11 = vector.broadcast %c0_i8 : i8 to vector<8x8xi8>
    %12 = arith.cmpi ne, %7, %11 : vector<8x8xi8>
    %cst_12 = arith.constant -1.000000e+09 : f32
    %13 = vector.broadcast %cst_12 : f32 to vector<8x8xf32>
    %14 = arith.select %12, %13, %10 : vector<8x8xi1>, vector<8x8xf32>
    %cst_13 = arith.constant dense<0xFF800000> : vector<8xf32>
    %15 = vector.multi_reduction <maximumf>, %14, %cst_13 [1] : vector<8x8xf32> to vector<8xf32>
    %16 = vector.shape_cast %15 : vector<8xf32> to vector<8x1xf32>
    %17 = vector.broadcast %16 : vector<8x1xf32> to vector<8x8xf32>
    %18 = arith.subf %14, %17 : vector<8x8xf32>
    %19 = math.exp %18 : vector<8x8xf32>
    %cst_14 = arith.constant dense<0.000000e+00> : vector<8xf32>
    %20 = vector.multi_reduction <add>, %19, %cst_14 [1] : vector<8x8xf32> to vector<8xf32>
    %21 = vector.shape_cast %20 : vector<8xf32> to vector<8x1xf32>
    %22 = tpu.reciprocal %21 {approx = true} : vector<8x1xf32> -> vector<8x1xf32>
    %23 = vector.broadcast %22 : vector<8x1xf32> to vector<8x8xf32>
    %24 = arith.mulf %19, %23 : vector<8x8xf32>
    %25 = arith.truncf %24 : vector<8x8xf32> to vector<8x8xbf16>
    %cst_15 = arith.constant dense<0.000000e+00> : vector<8x64xf32>
    %26 = tpu.matmul %25, %5, %cst_15 {dimension_numbers = #tpu.dot_dimension_numbers<[1], [0], [0], [1], [0, 0, 1, 1], [], []>} : vector<8x8xbf16>, vector<8x64xbf16>, vector<8x64xf32> -> vector<8x64xf32>
    %c0_16 = arith.constant 0 : index
    %c0_17 = arith.constant 0 : index
    %c0_18 = arith.constant 0 : index
    %27 = vector.load %arg7[%c0_16, %c0_17, %c0_18] : memref<1x8x8xbf16, #tpu.memory_space<vmem>>, vector<1x8x8xbf16>
    %28 = vector.shape_cast %27 : vector<1x8x8xbf16> to vector<8x8xbf16>
    %29 = vector.shape_cast %25 : vector<8x8xbf16> to vector<1x8x8xbf16>
    tpu.vector_store %arg7[%c0_16, %c0_17, %c0_18], %29 {strides = array<i32>} : memref<1x8x8xbf16, #tpu.memory_space<vmem>>, vector<1x8x8xbf16>,
    %c0_19 = arith.constant 0 : index
    %c0_20 = arith.constant 0 : index
    %c0_21 = arith.constant 0 : index
    %30 = vector.load %arg6[%c0_19, %c0_20, %c0_21] : memref<1x8x64xf32, #tpu.memory_space<vmem>>, vector<1x8x64xf32>
    %31 = vector.shape_cast %30 : vector<1x8x64xf32> to vector<8x64xf32>
    %32 = vector.shape_cast %26 : vector<8x64xf32> to vector<1x8x64xf32>
    tpu.vector_store %arg6[%c0_19, %c0_20, %c0_21], %32 {strides = array<i32>} : memref<1x8x64xf32, #tpu.memory_space<vmem>>, vector<1x8x64xf32>,
    return
  }
  func.func @transform_0(%arg0: i32, %arg1: i32) -> (i32, i32, i32) {
    %c0_i32 = arith.constant 0 : i32
    %c0_i32_0 = arith.constant 0 : i32
    return %arg0, %arg1, %c0_i32 : i32, i32, i32
  }
  func.func @transform_1(%arg0: i32, %arg1: i32) -> (i32, i32, i32) {
    %c0_i32 = arith.constant 0 : i32
    %c0_i32_0 = arith.constant 0 : i32
    %c0_i32_1 = arith.constant 0 : i32
    return %arg0, %c0_i32, %c0_i32_0 : i32, i32, i32
  }
  func.func @transform_2(%arg0: i32, %arg1: i32) -> (i32, i32, i32) {
    %c0_i32 = arith.constant 0 : i32
    %c0_i32_0 = arith.constant 0 : i32
    %c0_i32_1 = arith.constant 0 : i32
    return %arg0, %c0_i32, %c0_i32_0 : i32, i32, i32
  }
  func.func @transform_3(%arg0: i32, %arg1: i32) -> (i32, i32, i32) {
    %c0_i32 = arith.constant 0 : i32
    %c0_i32_0 = arith.constant 0 : i32
    return %arg0, %arg1, %c0_i32 : i32, i32, i32
  }
  func.func @transform_4(%arg0: i32, %arg1: i32) -> (i32, i32, i32) {
    %c0_i32 = arith.constant 0 : i32
    %c0_i32_0 = arith.constant 0 : i32
    return %arg0, %arg1, %c0_i32 : i32, i32, i32
  }
  func.func @transform_5(%arg0: i32, %arg1: i32) -> (i32, i32, i32) {
    %c0_i32 = arith.constant 0 : i32
    %c0_i32_0 = arith.constant 0 : i32
    return %arg0, %arg1, %c0_i32 : i32, i32, i32
  }
}

</mosaic_0001>

<llo_original>
// kernel: tpu_custom_call.1
$region0: #{tpu_custom_call.1}
  #allocation0 [shape = 'u32[]', space=smem, size = 0x4, offset = 0x4, fixed_abs, tag = 'smem constant byte address 0x4 - core index']
  #allocation1 [shape = 'u32[144,128]{1,0:T(1,128)}', space=vmem, size = 0x12000, scoped, tag = 'internal scratch']
  %s0 = inlined_call_operand.hbm [shape: bf16[4,8,64], index: 0, kind: input, shape index: {}]
  %s1 = inlined_call_operand.hbm [shape: bf16[4,8,64], index: 1, kind: input, shape index: {}]
  %s2 = inlined_call_operand.hbm [shape: bf16[4,8,64], index: 2, kind: input, shape index: {}]
  %s3 = inlined_call_operand.hbm [shape: s8[4,8,8], index: 3, kind: input, shape index: {}]
  %s4 = inlined_call_operand.hbm [shape: f32[4,8,64], index: 4, kind: output, shape index: {0}]
  %s5 = inlined_call_operand.hbm [shape: bf16[4,8,8], index: 5, kind: output, shape index: {1}]
  %6 = xla_tuple %s4, %s5
  %s7 = sld [smem:[#allocation0]]
  $region73: #{tpu_custom_call.1} parent=0
    _
  %s9 = ssub.s32 1, %s7
  %s10 = scalar_select 0, %s9, %s7
  $region1: #{tpu_custom_call.1} parent=0
    #allocation2 [shape = 'u8[4096]{0}', space=vmem, size = 0x1000, scoped, tag = 'input window, operand 0']
    #allocation3 [shape = 's32[2]{0}', space=sflag, size = 0x8, scoped, tag = 'scoped memory for tpu_custom_call.1']
    #allocation4 [shape = 's32[2]{0}', space=sflag, size = 0x8, scoped, tag = 'scoped memory for tpu_custom_call.1']
    #allocation5 [shape = 'u8[4096]{0}', space=vmem, size = 0x1000, scoped, tag = 'input window, operand 1']
    #allocation6 [shape = 's32[2]{0}', space=sflag, size = 0x8, scoped, tag = 'scoped memory for tpu_custom_call.1']
    #allocation7 [shape = 'u8[4096]{0}', space=vmem, size = 0x1000, scoped, tag = 'input window, operand 2']
    #allocation8 [shape = 'u8[2048]{0}', space=vmem, size = 0x800, scoped, tag = 'input window, operand 3']
    #allocation9 [shape = 's32[2]{0}', space=sflag, size = 0x8, scoped, tag = 'scoped memory for tpu_custom_call.1']
    #allocation10 [shape = 'u8[8192]{0}', space=vmem, size = 0x2000, scoped, tag = 'output window, operand 0']
    #allocation11 [shape = 'u8[4096]{0}', space=vmem, size = 0x1000, scoped, tag = 'output window, operand 1']
    #allocation12 [shape = 's32[2]{0}', space=sflag, size = 0x8, scoped, tag = 'scoped memory for tpu_custom_call.1']
    %11 = vsyncpa [#allocation3], 0
    %s12 = scalar_lea.sflag [#allocation3], 1
    %13 = vsyncpa %s12, 0
    %14 = vsyncpa [#allocation6], 0
    %s15 = scalar_lea.sflag [#allocation6], 1
    %16 = vsyncpa %s15, 0
    %17 = vsyncpa [#allocation9], 0
    %s18 = scalar_lea.sflag [#allocation9], 1
    %19 = vsyncpa %s18, 0
    %20 = vsyncpa [#allocation4], 0
    %s21 = scalar_lea.sflag [#allocation4], 1
    %22 = vsyncpa %s21, 0
    %23 = vsyncpa [#allocation12], 0
    %s24 = scalar_lea.sflag [#allocation12], 1
    %25 = vsyncpa %s24, 0
    loop: start=0, step=1, limit=6
    $region2: #{tpu_custom_call.1} parent=1 // loop_pre_header
      _
    $region3: #{tpu_custom_call.1} parent=1 // loop_header
      %s27 = sphi 0, %s31
      %p28 = scmp.ge.s32.totalorder %s27, 6
      %s34 = sphi 0, %s46
      %s35 = sphi 0, %s42
      %s36 = sphi 0, %s34
      %s37 = sphi 0, %s35
      %s38 = sphi 0, %s36
      %s39 = sphi 0, %s37
      %s51 = sphi 0, %s53
      %s54 = sphi 0, %s51
      %s55 = sphi 0, %s54
      %s71 = sphi 0, %s55
      %s77 = sphi 0, %s79
      %s80 = sphi 0, %s77
      %s81 = sphi 0, %s80
      %s97 = sphi 0, %s81
      %s103 = sphi 0, %s105
      %s106 = sphi 0, %s103
      %s107 = sphi 0, %s106
      %s123 = sphi 0, %s107
      %s131 = sphi 0, %s133
      %s134 = sphi 0, %s131
      %s135 = sphi 0, %s134
      %s151 = sphi 0, %s135
      %s159 = sphi 0, %s161
      %s162 = sphi 0, %s159
      %s163 = sphi 0, %s162
      %s179 = sphi 0, %s163
      %s187 = sphi 0, %s189
      %s190 = sphi 0, %s187
      %s191 = sphi 0, %s190
      %s207 = sphi 0, %s191
    $region4: #{tpu_custom_call.1} parent=1 // loop_header_branch
      %30 = sbr.rel (%p28) target = $region8
    $region5: #{tpu_custom_call.1} parent=1 // loop_body
      %s32 = ssub.s32 %s27, 1
      %s33 = ssub.s32 %s27, 2
      %s40 = sadd.s32 1, %s35
      %p41 = scmp.ge.s32.totalorder %s40, 1
      %s42 = scalar_select %p41, 0, %s40
      %s43 = sadd.s32 1, %s34
      %s44 = scalar_select %p41, %s43, %s34
      %p45 = scmp.ge.s32.totalorder %s44, 4
      %s46 = scalar_select %p45, 0, %s44
      %s47 = ssub.s32 %s34, %s46
      %s48 = ssub.s32 %s35, %s42
      %s49 = sor.u32 %s47, %s48
      %p50 = scmp.eq.s32.totalorder %s49, 0
      %s52 = sadd.s32 %s51, 1
      %s53 = scalar_select %p50, %s51, %s52
      %p56 = pneg %p50
      %p57 = scmp.eq.s32.totalorder %s27, 3
      %p58 = por %p56, %p57
      %p59 = scmp.ne.s32.totalorder %s51, %s54
      %p60 = scmp.eq.s32.totalorder %s27, 0
      %p61 = por %p59, %p60
      %p62 = scmp.ne.s32.totalorder %s51, %s54
      %p63 = scmp.eq.s32.totalorder %s32, 3
      %p64 = por %p62, %p63
      %p65 = scmp.ne.s32.totalorder %s54, %s55
      %p66 = scmp.eq.s32.totalorder %s32, 0
      %p67 = por %p65, %p66
      %p68 = scmp.ne.s32.totalorder %s54, %s55
      %p69 = scmp.eq.s32.totalorder %s33, 3
      %p70 = por %p68, %p69
      %p72 = scmp.ne.s32.totalorder %s55, %s71
      %p73 = scmp.eq.s32.totalorder %s33, 0
      %p74 = por %p72, %p73
      %s75 = ssub.s32 %s34, %s46
      %p76 = scmp.eq.s32.totalorder %s75, 0
      %s78 = sadd.s32 %s77, 1
      %s79 = scalar_select %p76, %s77, %s78
      %p82 = pneg %p76
      %p83 = scmp.eq.s32.totalorder %s27, 3
      %p84 = por %p82, %p83
      %p85 = scmp.ne.s32.totalorder %s77, %s80
      %p86 = scmp.eq.s32.totalorder %s27, 0
      %p87 = por %p85, %p86
      %p88 = scmp.ne.s32.totalorder %s77, %s80
      %p89 = scmp.eq.s32.totalorder %s32, 3
      %p90 = por %p88, %p89
      %p91 = scmp.ne.s32.totalorder %s80, %s81
      %p92 = scmp.eq.s32.totalorder %s32, 0
      %p93 = por %p91, %p92
      %p94 = scmp.ne.s32.totalorder %s80, %s81
      %p95 = scmp.eq.s32.totalorder %s33, 3
      %p96 = por %p94, %p95
      %p98 = scmp.ne.s32.totalorder %s81, %s97
      %p99 = scmp.eq.s32.totalorder %s33, 0
      %p100 = por %p98, %p99
      %s101 = ssub.s32 %s34, %s46
      %p102 = scmp.eq.s32.totalorder %s101, 0
      %s104 = sadd.s32 %s103, 1
      %s105 = scalar_select %p102, %s103, %s104
      %p108 = pneg %p102
      %p109 = scmp.eq.s32.totalorder %s27, 3
      %p110 = por %p108, %p109
      %p111 = scmp.ne.s32.totalorder %s103, %s106
      %p112 = scmp.eq.s32.totalorder %s27, 0
      %p113 = por %p111, %p112
      %p114 = scmp.ne.s32.totalorder %s103, %s106
      %p115 = scmp.eq.s32.totalorder %s32, 3
      %p116 = por %p114, %p115
      %p117 = scmp.ne.s32.totalorder %s106, %s107
      %p118 = scmp.eq.s32.totalorder %s32, 0
      %p119 = por %p117, %p118
      %p120 = scmp.ne.s32.totalorder %s106, %s107
      %p121 = scmp.eq.s32.totalorder %s33, 3
      %p122 = por %p120, %p121
      %p124 = scmp.ne.s32.totalorder %s107, %s123
      %p125 = scmp.eq.s32.totalorder %s33, 0
      %p126 = por %p124, %p125
      %s127 = ssub.s32 %s34, %s46
      %s128 = ssub.s32 %s35, %s42
      %s129 = sor.u32 %s127, %s128
      %p130 = scmp.eq.s32.totalorder %s129, 0
      %s132 = sadd.s32 %s131, 1
      %s133 = scalar_select %p130, %s131, %s132
      %p136 = pneg %p130
      %p137 = scmp.eq.s32.totalorder %s27, 3
      %p138 = por %p136, %p137
      %p139 = scmp.ne.s32.totalorder %s131, %s134
      %p140 = scmp.eq.s32.totalorder %s27, 0
      %p141 = por %p139, %p140
      %p142 = scmp.ne.s32.totalorder %s131, %s134
      %p143 = scmp.eq.s32.totalorder %s32, 3
      %p144 = por %p142, %p143
      %p145 = scmp.ne.s32.totalorder %s134, %s135
      %p146 = scmp.eq.s32.totalorder %s32, 0
      %p147 = por %p145, %p146
      %p148 = scmp.ne.s32.totalorder %s134, %s135
      %p149 = scmp.eq.s32.totalorder %s33, 3
      %p150 = por %p148, %p149
      %p152 = scmp.ne.s32.totalorder %s135, %s151
      %p153 = scmp.eq.s32.totalorder %s33, 0
      %p154 = por %p152, %p153
      %s155 = ssub.s32 %s34, %s46
      %s156 = ssub.s32 %s35, %s42
      %s157 = sor.u32 %s155, %s156
      %p158 = scmp.eq.s32.totalorder %s157, 0
      %s160 = sadd.s32 %s159, 1
      %s161 = scalar_select %p158, %s159, %s160
      %p164 = pneg %p158
      %p165 = scmp.eq.s32.totalorder %s27, 3
      %p166 = por %p164, %p165
      %p167 = scmp.ne.s32.totalorder %s159, %s162
      %p168 = scmp.eq.s32.totalorder %s27, 0
      %p169 = por %p167, %p168
      %p170 = scmp.ne.s32.totalorder %s159, %s162
      %p171 = scmp.eq.s32.totalorder %s32, 3
      %p172 = por %p170, %p171
      %p173 = scmp.ne.s32.totalorder %s162, %s163
      %p174 = scmp.eq.s32.totalorder %s32, 0
      %p175 = por %p173, %p174
      %p176 = scmp.ne.s32.totalorder %s162, %s163
      %p177 = scmp.eq.s32.totalorder %s33, 3
      %p178 = por %p176, %p177
      %p180 = scmp.ne.s32.totalorder %s163, %s179
      %p181 = scmp.eq.s32.totalorder %s33, 0
      %p182 = por %p180, %p181
      %s183 = ssub.s32 %s34, %s46
      %s184 = ssub.s32 %s35, %s42
      %s185 = sor.u32 %s183, %s184
      %p186 = scmp.eq.s32.totalorder %s185, 0
      %s188 = sadd.s32 %s187, 1
      %s189 = scalar_select %p186, %s187, %s188
      %p192 = pneg %p186
      %p193 = scmp.eq.s32.totalorder %s27, 3
      %p194 = por %p192, %p193
      %p195 = scmp.ne.s32.totalorder %s187, %s190
      %p196 = scmp.eq.s32.totalorder %s27, 0
      %p197 = por %p195, %p196
      %p198 = scmp.ne.s32.totalorder %s187, %s190
      %p199 = scmp.eq.s32.totalorder %s32, 3
      %p200 = por %p198, %p199
      %p201 = scmp.ne.s32.totalorder %s190, %s191
      %p202 = scmp.eq.s32.totalorder %s32, 0
      %p203 = por %p201, %p202
      %p204 = scmp.ne.s32.totalorder %s190, %s191
      %p205 = scmp.eq.s32.totalorder %s33, 3
      %p206 = por %p204, %p205
      %p208 = scmp.ne.s32.totalorder %s191, %s207
      %p209 = scmp.eq.s32.totalorder %s33, 0
      %p210 = por %p208, %p209
      %p211 = scmp.le.s32.totalorder 1, %s27
      %p212 = scmp.lt.s32.totalorder %s27, 5
      %p213 = pnand %p211, %p212
      %p214 = pneg %p213
      // Predicated region
      $region9: #{tpu_custom_call.1} parent=5 // pred_check
        _
      $region10: #{tpu_custom_call.1} parent=5 // pred_check_branch
        %216 = sbr.rel (%p213) target = $region12
      $region11: #{tpu_custom_call.1} parent=5 // pred_region
        %s217 = ssub.s32 %s27, 1
      $region12: #{tpu_custom_call.1} parent=5 // pred_fallthru
        _
      %p218 = scmp.lt.s32.totalorder %s27, 4
      // Predicated region
      $region13: #{tpu_custom_call.1} parent=5 // pred_check
        %p219 = pneg %p218
      $region14: #{tpu_custom_call.1} parent=5 // pred_check_branch
        %221 = sbr.rel (%p219) target = $region16
      $region15: #{tpu_custom_call.1} parent=5 // pred_region
        // Predicated region
        $region17: #{tpu_custom_call.1} parent=15 // pred_check
          %p222 = pneg %p61
        $region18: #{tpu_custom_call.1} parent=15 // pred_check_branch
          %224 = sbr.rel (%p222) target = $region20
        $region19: #{tpu_custom_call.1} parent=15 // pred_region
          %s225 = sand.u32 %s51, 1
          %s226 = scalar_lea.sflag [#allocation3], %s225
          %s227 = sand.u32 %s51, 1
          %s228 = smul.addr %s227, 4
          %s229 = scalar_lea.vmem [#allocation2], %s228
          %s231 = ssub.s32 64, 64
          %232 = vsyncadd %s226, %s231
          %s233 = sadd.s32 %s35, %s34
          %s234 = smul.addr %s233, 64
          %s235 = scalar_lea.hbm %s0, %s234
          %s237 = sshll.u32 %s229, 4
          %s238 = int_to_ptr.vmem [resolvable:$true] %s237
          %240 = dma.hbm_to_vmem [thread:$0]  %s235, 64, %s238, %s226
        $region20: #{tpu_custom_call.1} parent=15 // pred_fallthru
          _
        // Predicated region
        $region21: #{tpu_custom_call.1} parent=15 // pred_check
          %p241 = pneg %p87
        $region22: #{tpu_custom_call.1} parent=15 // pred_check_branch
          %243 = sbr.rel (%p241) target = $region24
        $region23: #{tpu_custom_call.1} parent=15 // pred_region
          %s244 = sand.u32 %s27, 1
          %s245 = scalar_lea.sflag [#allocation6], %s244
          %s246 = sand.u32 %s77, 1
          %s247 = smul.addr %s246, 4
          %s248 = scalar_lea.vmem [#allocation5], %s247
          %s250 = ssub.s32 64, 64
          %251 = vsyncadd %s245, %s250
          %s252 = smul.addr %s34, 64
          %s253 = scalar_lea.hbm %s1, %s252
          %s255 = sshll.u32 %s248, 4
          %s256 = int_to_ptr.vmem [resolvable:$true] %s255
          %258 = dma.hbm_to_vmem [thread:$0]  %s253, 64, %s256, %s245
        $region24: #{tpu_custom_call.1} parent=15 // pred_fallthru
          _
        // Predicated region
        $region25: #{tpu_custom_call.1} parent=15 // pred_check
          %p259 = pneg %p113
        $region26: #{tpu_custom_call.1} parent=15 // pred_check_branch
          %261 = sbr.rel (%p259) target = $region28
        $region27: #{tpu_custom_call.1} parent=15 // pred_region
          %s262 = sand.u32 %s27, 1
          %s263 = scalar_lea.sflag [#allocation6], %s262
          %s264 = sand.u32 %s103, 1
          %s265 = smul.addr %s264, 4
          %s266 = scalar_lea.vmem [#allocation7], %s265
          %s268 = ssub.s32 64, 64
          %269 = vsyncadd %s263, %s268
          %s270 = smul.addr %s34, 64
          %s271 = scalar_lea.hbm %s2, %s270
          %s273 = sshll.u32 %s266, 4
          %s274 = int_to_ptr.vmem [resolvable:$true] %s273
          %276 = dma.hbm_to_vmem [thread:$0]  %s271, 64, %s274, %s263
        $region28: #{tpu_custom_call.1} parent=15 // pred_fallthru
          _
        // Predicated region
        $region29: #{tpu_custom_call.1} parent=15 // pred_check
          %p277 = pneg %p141
        $region30: #{tpu_custom_call.1} parent=15 // pred_check_branch
          %279 = sbr.rel (%p277) target = $region32
        $region31: #{tpu_custom_call.1} parent=15 // pred_region
          %s280 = sand.u32 %s131, 1
          %s281 = scalar_lea.sflag [#allocation9], %s280
          %s282 = sand.u32 %s131, 1
          %s283 = smul.addr %s282, 2
          %s284 = scalar_lea.vmem [#allocation8], %s283
          %s286 = ssub.s32 32, 32
          %287 = vsyncadd %s281, %s286
          %s288 = sadd.s32 %s35, %s34
          %s289 = smul.addr %s288, 32
          %s290 = scalar_lea.hbm %s3, %s289
          %s292 = sshll.u32 %s284, 4
          %s293 = int_to_ptr.vmem [resolvable:$true] %s292
          %295 = dma.hbm_to_vmem [thread:$0]  %s290, 32, %s293, %s281
        $region32: #{tpu_custom_call.1} parent=15 // pred_fallthru
          _
      $region16: #{tpu_custom_call.1} parent=5 // pred_fallthru
        _
      %p296 = scmp.le.s32.totalorder 1, %s27
      %p297 = scmp.lt.s32.totalorder %s27, 5
      %p298 = pnand %p296, %p297
      %p299 = pneg %p298
      // Predicated region
      $region33: #{tpu_custom_call.1} parent=5 // pred_check
        _
      $region34: #{tpu_custom_call.1} parent=5 // pred_check_branch
        %301 = sbr.rel (%p298) target = $region36
      $region35: #{tpu_custom_call.1} parent=5 // pred_region
        %s302 = ssub.s32 %s27, 1
        %s303 = sand.u32 %s54, 1
        %s304 = scalar_lea.sflag [#allocation3], %s303
        %s305 = sand.u32 %s54, 1
        %s306 = smul.addr %s305, 4
        %s307 = scalar_lea.vmem [#allocation2], %s306
        // Predicated region
        $region37: #{tpu_custom_call.1} parent=35 // pred_check
          %p308 = pneg %p67
        $region38: #{tpu_custom_call.1} parent=35 // pred_check_branch
          %310 = sbr.rel (%p308) target = $region40
        $region39: #{tpu_custom_call.1} parent=35 // pred_region
          %311 = dma.done %s304, 64
        $region40: #{tpu_custom_call.1} parent=35 // pred_fallthru
          _
        %s312 = sand.u32 %s32, 1
        %s313 = scalar_lea.sflag [#allocation6], %s312
        %s314 = sand.u32 %s80, 1
        %s315 = smul.addr %s314, 4
        %s316 = scalar_lea.vmem [#allocation5], %s315
        // Predicated region
        $region41: #{tpu_custom_call.1} parent=35 // pred_check
          %p317 = pneg %p93
        $region42: #{tpu_custom_call.1} parent=35 // pred_check_branch
          %319 = sbr.rel (%p317) target = $region44
        $region43: #{tpu_custom_call.1} parent=35 // pred_region
          %320 = dma.done %s313, 64
        $region44: #{tpu_custom_call.1} parent=35 // pred_fallthru
          _
        %s321 = sand.u32 %s32, 1
        %s322 = scalar_lea.sflag [#allocation6], %s321
        %s323 = sand.u32 %s106, 1
        %s324 = smul.addr %s323, 4
        %s325 = scalar_lea.vmem [#allocation7], %s324
        // Predicated region
        $region45: #{tpu_custom_call.1} parent=35 // pred_check
          %p326 = pneg %p119
        $region46: #{tpu_custom_call.1} parent=35 // pred_check_branch
          %328 = sbr.rel (%p326) target = $region48
        $region47: #{tpu_custom_call.1} parent=35 // pred_region
          %329 = dma.done %s322, 64
        $region48: #{tpu_custom_call.1} parent=35 // pred_fallthru
          _
        %s330 = sand.u32 %s134, 1
        %s331 = scalar_lea.sflag [#allocation9], %s330
        %s332 = sand.u32 %s134, 1
        %s333 = smul.addr %s332, 2
        %s334 = scalar_lea.vmem [#allocation8], %s333
        // Predicated region
        $region49: #{tpu_custom_call.1} parent=35 // pred_check
          %p335 = pneg %p147
        $region50: #{tpu_custom_call.1} parent=35 // pred_check_branch
          %337 = sbr.rel (%p335) target = $region52
        $region51: #{tpu_custom_call.1} parent=35 // pred_region
          %338 = dma.done %s331, 32
        $region52: #{tpu_custom_call.1} parent=35 // pred_fallthru
          _
        %s339 = sand.u32 %s54, 1
        %s340 = scalar_lea.sflag [#allocation3], %s339
        %s341 = sand.u32 %s54, 1
        %s342 = smul.addr %s341, 4
        %s343 = scalar_lea.vmem [#allocation2], %s342
        %p344 = pneg %p67
        %p345 = pneg %p64
        %s346 = sand.u32 %s32, 1
        %s347 = scalar_lea.sflag [#allocation6], %s346
        %s348 = sand.u32 %s80, 1
        %s349 = smul.addr %s348, 4
        %s350 = scalar_lea.vmem [#allocation5], %s349
        %p351 = pneg %p93
        %p352 = pneg %p90
        %s353 = sand.u32 %s32, 1
        %s354 = scalar_lea.sflag [#allocation6], %s353
        %s355 = sand.u32 %s106, 1
        %s356 = smul.addr %s355, 4
        %s357 = scalar_lea.vmem [#allocation7], %s356
        %p358 = pneg %p119
        %p359 = pneg %p116
        %s360 = sand.u32 %s134, 1
        %s361 = scalar_lea.sflag [#allocation9], %s360
        %s362 = sand.u32 %s134, 1
        %s363 = smul.addr %s362, 2
        %s364 = scalar_lea.vmem [#allocation8], %s363
        %p365 = pneg %p147
        %p366 = pneg %p144
        %p367 = pneg %p175
        %p368 = pneg %p172
        %s369 = sand.u32 %s162, 1
        %s370 = scalar_lea.sflag [#allocation4], %s369
        %s371 = sand.u32 %s162, 1
        %s372 = smul.addr %s371, 8
        %s373 = scalar_lea.vmem [#allocation10], %s372
        %p374 = pneg %p203
        %p375 = pneg %p200
        %s376 = sand.u32 %s190, 1
        %s377 = scalar_lea.sflag [#allocation12], %s376
        %s378 = sand.u32 %s190, 1
        %s379 = smul.addr %s378, 4
        %s380 = scalar_lea.vmem [#allocation11], %s379
        %v385 = vld [vmem:[%s307] sm:$0xf]
        %v386 = vld [vmem:[%s316] sm:$0xf]
        %v387 = vld [vmem:[%s325] sm:$0xf]
        %v388 = vld [vmem:[%s334] sm:$0x3]
        %v389 = vmul.bf16 %v385, 1040203264
        %vm390 = vcmask 523264
        %v392 = vsel %vm390, %v389, 0
        %v395 = vsel %vm390, %v386, 0
        %397 = vmatprep.subr.bf16.mxu0 0
        %398 = vmatpush1.bf16.xpose.msra.mxu0 0
        %399 = vmatprep.subr.bf16.mxu0 0
        %400 = vmatpush1.bf16.xpose.msra.mxu0 0
        %401 = vmatprep.subr.bf16.mxu0 0
        %402 = vmatpush1.bf16.xpose.msra.mxu0 0
        %403 = vmatprep.subr.bf16.mxu0 0
        %404 = vmatpush1.bf16.xpose.msra.mxu0 0
        %405 = vmatprep.subr.bf16.mxu0 0
        %406 = vmatpush1.bf16.xpose.msra.mxu0 0
        %407 = vmatprep.subr.bf16.mxu0 0
        %408 = vmatpush1.bf16.xpose.msra.mxu0 0
        %409 = vmatprep.subr.bf16.mxu0 0
        %410 = vmatpush1.bf16.xpose.msra.mxu0 0
        %411 = vmatprep.subr.bf16.mxu0 0
        %412 = vmatpush1.bf16.xpose.msra.mxu0 %v395
        %413 = vmatprep.subr.bf16.mxu0 0
        %414 = vmatpush2.bf16.xpose.msra.mxu0 0
        %415 = vmatprep.subr.bf16.mxu0 0
        %416 = vmatpush2.bf16.xpose.msra.mxu0 0
        %417 = vmatprep.subr.bf16.mxu0 0
        %418 = vmatpush2.bf16.xpose.msra.mxu0 0
        %419 = vmatprep.subr.bf16.mxu0 0
        %420 = vmatpush2.bf16.xpose.msra.mxu0 0
        %421 = vmatprep.subr.bf16.mxu0 0
        %422 = vmatpush2.bf16.xpose.msra.mxu0 0
        %423 = vmatprep.subr.bf16.mxu0 0
        %424 = vmatpush2.bf16.xpose.msra.mxu0 0
        %425 = vmatprep.subr.bf16.mxu0 0
        %426 = vmatpush2.bf16.xpose.msra.mxu0 0
        %427 = vmatprep.subr.bf16.mxu0 0
        %428 = vmatpush2.bf16.xpose.msra.mxu0 0
        %429 = vmatprep.mubr.bf16.mxu0 0
        %430 = vmatmul.mubr.bf16.gmra.mxu0 %v392
        %v431 = vpop.f32.mrf.mxu0
        %v432 = vadd.f32 0.0, %v431
        %v433 = vpop.f32.mrf.mxu0
        %v434 = vpop.f32.mrf.mxu0
        %v435 = vpop.f32.mrf.mxu0
        %436 = vdwg.mxu0
        %vm437 = vnez %v388
        %v438 = vsel %vm437, 16843009, 0
        %v439 = vunpack.c.0.s8 %v438
        %vm440 = vcmp.ne.s32.totalorder %v439, 0
        %v441 = vsel %vm440, -1e+09, %v432
        %vm442 = vcmask 64512
        %v443 = vsel %vm442, %v441, -inf
        %444 = vmax.xlane.f32.xlu0 %v443
        %v445 = vpop.xlane.xlu0 %444
        %v446 = vsub.f32 %v441, %v445
        %v447 = vmul.f32 %v446, 1.442695
        %v448 = vpow.pop %v447
        %v449 = vsel %vm442, %v448, 0.0
        %450 = vadd.xlane.f32.xlu0 %v449
        %v451 = vpop.xlane.xlu0 %450
        %v452 = vrcp.pop %v451
        %v453 = vmul.f32 %v448, %v452
        %v454 = vpack.c.bf16 %v453, %v453
        %v456 = vsel %vm442, %v454, 0
        %vm458 = vcmask 1043456
        %v460 = vsel %vm458, %v387, 0
        %462 = vmatprep.subr.bf16.mxu0 0
        %463 = vmatpush1.bf16.msra.mxu0 0
        %464 = vmatprep.subr.bf16.mxu0 0
        %465 = vmatpush1.bf16.msra.mxu0 0
        %466 = vmatprep.subr.bf16.mxu0 0
        %467 = vmatpush1.bf16.msra.mxu0 0
        %468 = vmatprep.subr.bf16.mxu0 0
        %469 = vmatpush1.bf16.msra.mxu0 0
        %470 = vmatprep.subr.bf16.mxu0 0
        %471 = vmatpush1.bf16.msra.mxu0 0
        %472 = vmatprep.subr.bf16.mxu0 0
        %473 = vmatpush1.bf16.msra.mxu0 0
        %474 = vmatprep.subr.bf16.mxu0 0
        %475 = vmatpush1.bf16.msra.mxu0 0
        %476 = vmatprep.subr.bf16.mxu0 0
        %477 = vmatpush1.bf16.msra.mxu0 %v460
        %478 = vmatprep.subr.bf16.mxu0 0
        %479 = vmatpush2.bf16.msra.mxu0 0
        %480 = vmatprep.subr.bf16.mxu0 0
        %481 = vmatpush2.bf16.msra.mxu0 0
        %482 = vmatprep.subr.bf16.mxu0 0
        %483 = vmatpush2.bf16.msra.mxu0 0
        %484 = vmatprep.subr.bf16.mxu0 0
        %485 = vmatpush2.bf16.msra.mxu0 0
        %486 = vmatprep.subr.bf16.mxu0 0
        %487 = vmatpush2.bf16.msra.mxu0 0
        %488 = vmatprep.subr.bf16.mxu0 0
        %489 = vmatpush2.bf16.msra.mxu0 0
        %490 = vmatprep.subr.bf16.mxu0 0
        %491 = vmatpush2.bf16.msra.mxu0 0
        %492 = vmatprep.subr.bf16.mxu0 0
        %493 = vmatpush2.bf16.msra.mxu0 0
        %494 = vmatprep.mubr.bf16.mxu0 0
        %495 = vmatmul.mubr.bf16.gmra.mxu0 %v456
        %v496 = vpop.f32.mrf.mxu0
        %v497 = vadd.f32 0.0, %v496
        %v498 = vpop.f32.mrf.mxu0
        %v499 = vpop.f32.mrf.mxu0
        %v500 = vpop.f32.mrf.mxu0
        %501 = vdwg.mxu0
        %vm502 = vcmask 60416
        %503 = vst.msk [vmem:[%s380] sm:$0xf] %vm502, %v454
        %504 = vst.msk [vmem:[%s373] sm:$0xff] %vm390, %v497
        %s505 = sand.u32 %s162, 1
        %s506 = scalar_lea.sflag [#allocation4], %s505
        %s507 = sand.u32 %s162, 1
        %s508 = smul.addr %s507, 8
        %s509 = scalar_lea.vmem [#allocation10], %s508
        %s510 = sand.u32 %s190, 1
        %s511 = scalar_lea.sflag [#allocation12], %s510
        %s512 = sand.u32 %s190, 1
        %s513 = smul.addr %s512, 4
        %s514 = scalar_lea.vmem [#allocation11], %s513
        // Predicated region
        $region53: #{tpu_custom_call.1} parent=35 // pred_check
          %p515 = pneg %p172
        $region54: #{tpu_custom_call.1} parent=35 // pred_check_branch
          %517 = sbr.rel (%p515) target = $region56
        $region55: #{tpu_custom_call.1} parent=35 // pred_region
          %s519 = ssub.s32 128, 128
          %520 = vsyncadd %s506, %s519
          %s521 = sadd.s32 %s37, %s36
          %s522 = smul.addr %s521, 128
          %s523 = scalar_lea.hbm %s4, %s522
          %s525 = sshll.u32 %s509, 4
          %s526 = int_to_ptr.vmem [resolvable:$true] %s525
          %528 = dma.vmem_to_hbm [thread:$0]  %s526, 128, %s523, %s506
        $region56: #{tpu_custom_call.1} parent=35 // pred_fallthru
          _
        // Predicated region
        $region57: #{tpu_custom_call.1} parent=35 // pred_check
          %p529 = pneg %p200
        $region58: #{tpu_custom_call.1} parent=35 // pred_check_branch
          %531 = sbr.rel (%p529) target = $region60
        $region59: #{tpu_custom_call.1} parent=35 // pred_region
          %s533 = ssub.s32 64, 64
          %534 = vsyncadd %s511, %s533
          %s535 = sadd.s32 %s37, %s36
          %s536 = smul.addr %s535, 64
          %s537 = scalar_lea.hbm %s5, %s536
          %s539 = sshll.u32 %s514, 4
          %s540 = int_to_ptr.vmem [resolvable:$true] %s539
          %542 = dma.vmem_to_hbm [thread:$0]  %s540, 64, %s537, %s511
        $region60: #{tpu_custom_call.1} parent=35 // pred_fallthru
          _
      $region36: #{tpu_custom_call.1} parent=5 // pred_fallthru
        _
      %p543 = scmp.le.s32.totalorder 2, %s27
      // Predicated region
      $region61: #{tpu_custom_call.1} parent=5 // pred_check
        %p544 = pneg %p543
      $region62: #{tpu_custom_call.1} parent=5 // pred_check_branch
        %546 = sbr.rel (%p544) target = $region64
      $region63: #{tpu_custom_call.1} parent=5 // pred_region
        %s547 = ssub.s32 %s27, 2
        // Predicated region
        $region65: #{tpu_custom_call.1} parent=63 // pred_check
          %p548 = pneg %p178
        $region66: #{tpu_custom_call.1} parent=63 // pred_check_branch
          %550 = sbr.rel (%p548) target = $region68
        $region67: #{tpu_custom_call.1} parent=63 // pred_region
          %s551 = sand.u32 %s163, 1
          %s552 = scalar_lea.sflag [#allocation4], %s551
          %s553 = sand.u32 %s163, 1
          %s554 = smul.addr %s553, 8
          %s555 = scalar_lea.vmem [#allocation10], %s554
          %556 = dma.done %s552, 128
        $region68: #{tpu_custom_call.1} parent=63 // pred_fallthru
          _
        // Predicated region
        $region69: #{tpu_custom_call.1} parent=63 // pred_check
          %p557 = pneg %p206
        $region70: #{tpu_custom_call.1} parent=63 // pred_check_branch
          %559 = sbr.rel (%p557) target = $region72
        $region71: #{tpu_custom_call.1} parent=63 // pred_region
          %s560 = sand.u32 %s191, 1
          %s561 = scalar_lea.sflag [#allocation12], %s560
          %s562 = sand.u32 %s191, 1
          %s563 = smul.addr %s562, 4
          %s564 = scalar_lea.vmem [#allocation11], %s563
          %565 = dma.done %s561, 64
        $region72: #{tpu_custom_call.1} parent=63 // pred_fallthru
          _
      $region64: #{tpu_custom_call.1} parent=5 // pred_fallthru
        _
    $region6: #{tpu_custom_call.1} parent=1 // loop_footer
      %s31 = sadd.s32 1, %s27
    $region7: #{tpu_custom_call.1} parent=1 // loop_footer_branch
      %26 = sbr.rel target = $region3
    $region8: #{tpu_custom_call.1} parent=1 // loop_exit
      _
    %566 = vsyncpa [#allocation3], 1
    %s567 = scalar_lea.sflag [#allocation3], 1
    %568 = vsyncpa %s567, 1
    %569 = vsyncpa [#allocation6], 1
    %s570 = scalar_lea.sflag [#allocation6], 1
    %571 = vsyncpa %s570, 1
    %572 = vsyncpa [#allocation9], 1
    %s573 = scalar_lea.sflag [#allocation9], 1
    %574 = vsyncpa %s573, 1
    %575 = vsyncpa [#allocation4], 1
    %s576 = scalar_lea.sflag [#allocation4], 1
    %577 = vsyncpa %s576, 1
    %578 = vsyncpa [#allocation12], 1
    %s579 = scalar_lea.sflag [#allocation12], 1
    %580 = vsyncpa %s579, 1

</llo_original>
